<compile_context>
chip_gen: v6e
topology: v6e:2x2x1
jax: 0.10.0
libtpu: 0.0.40
codegen_flags: <defaults>
</compile_context>

<pallas_src>
import functools

import jax
import jax.numpy as jnp
from jax import lax
from jax.experimental import pallas as pl
from jax.experimental.pallas import tpu as pltpu


# ----------------------------------------------------------------------------
# Fused forward kernel (single grid step).
# ----------------------------------------------------------------------------
def _cnn_text_fused_kernel(patches_ref, wflat_ref, bias_ref, tmask_ref,
                           lft_ref, sel_ref, gath_ref, w1_ref, w2_ref,
                           fcb_ref, o_ref):
    # patches_ref : (B*Tp, Kmax*E) im2col'd input (built in the wrapper)
    # wflat_ref   : (Kmax*E, D)    conv weights, banks stacked on channels,
    #                              taps >= K_j zeroed for bank j
    # bias_ref    : (1, D)         conv biases (banks concatenated)
    # tmask_ref   : (B*Tp, D)      0 where the time step is valid for that
    #                              bank, -1e30 otherwise (masks the max-pool)
    # lft_ref     : (D, Cn)        precomputed label features, transposed
    # sel_ref     : (B, B, Cn)     sel[b,c,j] = [(b*Cn + j) % B == c]
    # gath_ref    : (B, Cn, D)     gath[b,j,:] = l_feat[(b*Cn + j) // B, :]
    # w1_ref/w2_ref : (D, N)       fc1 weight split over [x_feat, finalx]
    # fcb_ref     : (1, N)         fc1 bias
    # o_ref       : (B, N)         logits
    B, _ = o_ref.shape
    D = wflat_ref.shape[1]
    Tp = patches_ref.shape[0] // B

    # --- conv: all banks / taps / batch rows in ONE MXU matmul --------------
    conv = jnp.dot(patches_ref[...], wflat_ref[...],
                   preferred_element_type=jnp.float32)            # (B*Tp, D)
    conv = conv + tmask_ref[...]            # mask per-bank-invalid time steps

    # --- per-batch-row time max-pool, then bias + ReLU ----------------------
    # Rows are assembled with masked sublane broadcasts (no scratch buffers,
    # no concatenate/reshape): x_pool[b, :] = max_t conv[b*Tp + t, :].
    row_id = lax.broadcasted_iota(jnp.int32, (B, 1), 0)           # (B, 1)
    x_pool = jnp.zeros((B, D), jnp.float32)
    for b in range(B):                      # B is tiny & static
        pb = jnp.max(conv[b * Tp:(b + 1) * Tp, :], axis=0, keepdims=True)
        x_pool = x_pool + jnp.where(row_id == b, pb, 0.0)
    x_feat = jnp.maximum(x_pool + bias_ref[...], 0.0)             # (B, D)

    # --- attention scores: a = exp(tanh(x @ l^T)) / row-sum -----------------
    # (tanh bounds the logits to [-1, 1], so exp without max-subtraction is ok)
    m = jnp.tanh(jnp.dot(x_feat, lft_ref[...],
                         preferred_element_type=jnp.float32))     # (B, Cn)
    e = jnp.exp(m)
    a = e / jnp.sum(e, axis=1, keepdims=True)                     # exact divide

    # --- attention apply (absorbs torch reshape(a, [class_num, -1])) --------
    # finalx[c,:] = sum_{b,j} a[b,j] * sel[b,c,j] * gath[b,j,:]
    #            -> B full-width (B,Cn)@(Cn,D) matmuls, no lf2, no scratch.
    finalx = jnp.zeros((B, D), jnp.float32)
    for b in range(B):
        finalx = finalx + jnp.dot(sel_ref[b] * a[b:b + 1, :], gath_ref[b],
                                  preferred_element_type=jnp.float32)

    # --- fc1 over concat(x_feat, finalx), expressed as split matmuls --------
    # TODO(synk): nn.Dropout is identity at inference; train-mode RNG mask not implemented.
    o_ref[...] = (jnp.dot(x_feat, w1_ref[...], preferred_element_type=jnp.float32)
                  + jnp.dot(finalx, w2_ref[...], preferred_element_type=jnp.float32)
                  + fcb_ref[...])


# ----------------------------------------------------------------------------
# Pure-JAX conv block (used once at setup for the label branch, and by the
# reference check).
# ----------------------------------------------------------------------------
def _conv_feats_jax(inp, convs):
    feats = []
    for (w, b) in convs:
        K, _, C = w.shape
        T = inp.shape[1] - K + 1
        acc = jnp.zeros((inp.shape[0], T, C), jnp.float32)
        for k in range(K):
            acc = acc + jnp.einsum("ble,ec->blc", inp[:, k:k + T, :], w[k])
        acc = jnp.maximum(acc + b[None, :, :], 0.0)
        feats.append(jnp.max(acc, axis=1))
    return jnp.concatenate(feats, axis=1)


# ----------------------------------------------------------------------------
# One-time parameter preprocessing (all input-independent).
# ----------------------------------------------------------------------------
def prepare_fused(params, kernel_sizes, batch, seq_len):
    convs = params["convs"]
    E = convs[0][0].shape[1]
    C = convs[0][0].shape[2]
    D = len(kernel_sizes) * C
    Kmax, Kmin = max(kernel_sizes), min(kernel_sizes)
    # Review item: PyTorch would error if a bank has zero valid positions.
    assert seq_len >= Kmax, "seq_len must be >= max(kernel_sizes)"
    Tm = seq_len - Kmin + 1
    Tp = ((Tm + 7) // 8) * 8    # sublane-aligned pool window per batch row

    # Banks fused along output channels; taps beyond each bank's K are zero.
    w_taps = jnp.zeros((Kmax, E, D), jnp.float32)
    for j, ((w, _), K) in enumerate(zip(convs, kernel_sizes)):
        w_taps = w_taps.at[:K, :, j * C:(j + 1) * C].set(w)
    w_flat = w_taps.reshape(Kmax * E, D)            # im2col weight: row k*E+e
    bias_all = jnp.concatenate([b for (_, b) in convs], axis=1)       # (1, D)

    # Per-bank / per-batch-row valid-time mask for the max-pool.
    valid_len = jnp.array([seq_len - K + 1 for K in kernel_sizes], jnp.int32)
    per_chan = jnp.repeat(valid_len, C)                               # (D,)
    tmask_row = jnp.where(jnp.arange(Tp)[:, None] < per_chan[None, :],
                          0.0, -1e30).astype(jnp.float32)             # (Tp, D)
    tmask = jnp.tile(tmask_row, (batch, 1))                           # (B*Tp, D)

    # Label branch is input-independent -> precompute once.
    l_feat = _conv_feats_jax(params["label"], convs)                  # (Cn, D)
    Cn = l_feat.shape[0]
    B = batch

    # finalx[c,:] = sum_f [f % B == c] * a_flat[f] * l_feat[f // B, :]
    # (absorbs torch.Tensor.reshape(a, [class_num, -1])); decomposed per
    # source batch row b (f = b*Cn + j) into sel/gath tensors.
    f = jnp.arange(B)[:, None] * Cn + jnp.arange(Cn)[None, :]         # (B, Cn)
    sel = (f[:, None, :] % B ==
           jnp.arange(B)[None, :, None]).astype(jnp.float32)          # (B, B, Cn)
    gath = l_feat[f // B]                                             # (B, Cn, D)

    arrays = dict(w_flat=w_flat, bias=bias_all, tmask=tmask,
                  lf_t=l_feat.T, sel=sel, gath=gath,
                  w1=params["fc_w_t"][:D], w2=params["fc_w_t"][D:],
                  fc_b=params["fc_b"])
    statics = dict(kmax=Kmax, tp=Tp)
    return arrays, statics


# ----------------------------------------------------------------------------
# Forward: wrapper-side im2col + one pallas_call, grid=(1,).
# ----------------------------------------------------------------------------
def cnn_text_forward(x, fused, *, kmax, tp):
    B, L, E = x.shape
    _, N = fused["w1"].shape
    # Zero-pad time so every shifted window row t in [0, tp) is in-bounds,
    # then im2col: patches[b*tp + t, k*E + e] = x_padded[b, t + k, e].
    xp = jnp.pad(x, ((0, 0), (0, tp + kmax - 1 - L), (0, 0)))
    patches = jnp.concatenate([xp[:, k:k + tp, :] for k in range(kmax)],
                              axis=-1)                       # (B, tp, kmax*E)
    patches = patches.reshape(B * tp, kmax * E)

    return pl.pallas_call(
        _cnn_text_fused_kernel,
        out_shape=jax.ShapeDtypeStruct((B, N), jnp.float32),
        grid=(1,),
        in_specs=[
            pl.BlockSpec(patches.shape, lambda i: (0, 0)),
            pl.BlockSpec(fused["w_flat"].shape, lambda i: (0, 0)),
            pl.BlockSpec(fused["bias"].shape, lambda i: (0, 0)),
            pl.BlockSpec(fused["tmask"].shape, lambda i: (0, 0)),
            pl.BlockSpec(fused["lf_t"].shape, lambda i: (0, 0)),
            pl.BlockSpec(fused["sel"].shape, lambda i: (0, 0, 0)),
            pl.BlockSpec(fused["gath"].shape, lambda i: (0, 0, 0)),
            pl.BlockSpec(fused["w1"].shape, lambda i: (0, 0)),
            pl.BlockSpec(fused["w2"].shape, lambda i: (0, 0)),
            pl.BlockSpec(fused["fc_b"].shape, lambda i: (0, 0)),
        ],
        out_specs=pl.BlockSpec((B, N), lambda i: (0, 0)),
        # Single grid step: the attention reshape couples all batch rows, so
        # the batch axis cannot be split across grid steps / TensorCores.
        compiler_params=pltpu.CompilerParams(
            dimension_semantics=("arbitrary",)),
    )(patches, fused["w_flat"], fused["bias"], fused["tmask"], fused["lf_t"],
      fused["sel"], fused["gath"], fused["w1"], fused["w2"], fused["fc_b"])


# ----------------------------------------------------------------------------
# Pure-JAX reference (faithful to the PyTorch module, incl. the raw reshape).
# ----------------------------------------------------------------------------
def reference_forward(x, params, class_num):
    xf = _conv_feats_jax(x, params["convs"])
    lf = _conv_feats_jax(params["label"], params["convs"])
    m = jnp.tanh(xf @ lf.T)
    e = jnp.exp(m)
    a = e / jnp.sum(e, axis=1, keepdims=True)
    ar = a.reshape(class_num, -1)            # torch.Tensor.reshape semantics
    finalx = (lf.T @ ar).T
    out = jnp.concatenate([xf, finalx], axis=1)
    return out @ params["fc_w_t"] + params["fc_b"]


if __name__ == "__main__":
    # Module hyperparameters (small, consistent with the PyTorch __init__).
    batch = 2
    seq_len = 16
    label_len = 8
    embed_dim = 32
    kernel_num = 8
    kernel_sizes = (3, 4, 5)
    class_num = 4
    D = len(kernel_sizes) * kernel_num       # 24
    # dropout = 0.5 (identity at inference)

    key = jax.random.PRNGKey(0)
    keys = jax.random.split(key, 10)

    convs = []
    for idx, K in enumerate(kernel_sizes):
        w = 0.1 * jax.random.normal(keys[idx], (K, embed_dim, kernel_num), jnp.float32)
        b = 0.1 * jax.random.normal(keys[3 + idx], (1, kernel_num), jnp.float32)
        convs.append((w, b))

    label = jax.random.normal(keys[6], (class_num, label_len, embed_dim), jnp.float32)
    fc_w_t = 0.1 * jax.random.normal(keys[7], (2 * D, class_num), jnp.float32)  # fc1.weight^T
    fc_b = 0.1 * jax.random.normal(keys[8], (1, class_num), jnp.float32)
    x = jax.random.normal(keys[9], (batch, seq_len, embed_dim), jnp.float32)

    params = {"convs": convs, "label": label, "fc_w_t": fc_w_t, "fc_b": fc_b}

    fused, statics = prepare_fused(params, kernel_sizes, batch, seq_len)
    fwd = jax.jit(functools.partial(cnn_text_forward, **statics))
    logit = fwd(x, fused)
    jax.block_until_ready(logit)

    ref = reference_forward(x, params, class_num)
    assert logit.shape == (batch, class_num)
    # 5e-3 tolerance covers MXU-vs-XLA f32 accumulation-order / precision
    # differences (same bound the previous, approved version used).
    assert jnp.allclose(logit, ref, atol=5e-3, rtol=5e-3), (logit, ref)

    print("KERNEL_OK")
</pallas_src>

<mosaic_0001>
module attributes {stable_mosaic.version = 11 : i64} {
  func.func @_cnn_text_fused_kernel(%arg0: i32, %arg1: memref<32x160xf32, #tpu.memory_space<vmem>>, %arg2: memref<160x24xf32, #tpu.memory_space<vmem>>, %arg3: memref<1x24xf32, #tpu.memory_space<vmem>>, %arg4: memref<32x24xf32, #tpu.memory_space<vmem>>, %arg5: memref<24x4xf32, #tpu.memory_space<vmem>>, %arg6: memref<2x2x4xf32, #tpu.memory_space<vmem>>, %arg7: memref<2x4x24xf32, #tpu.memory_space<vmem>>, %arg8: memref<24x4xf32, #tpu.memory_space<vmem>>, %arg9: memref<24x4xf32, #tpu.memory_space<vmem>>, %arg10: memref<1x4xf32, #tpu.memory_space<vmem>>, %arg11: memref<2x4xf32, #tpu.memory_space<vmem>>) attributes {dimension_semantics = [#tpu.dimension_semantics<arbitrary>], iteration_bounds = array<i64: 1>, scalar_prefetch = 0 : i64, scratch_operands = 0 : i64, tpu.core_type = #tpu.core_type<tc>, window_params = [{pipeline_mode = #tpu.pipeline_mode<synchronous>, transform_indices = @transform_0, window_bounds = array<i64: 32, 160>}, {pipeline_mode = #tpu.pipeline_mode<synchronous>, transform_indices = @transform_1, window_bounds = array<i64: 160, 24>}, {pipeline_mode = #tpu.pipeline_mode<synchronous>, transform_indices = @transform_2, window_bounds = array<i64: 1, 24>}, {pipeline_mode = #tpu.pipeline_mode<synchronous>, transform_indices = @transform_3, window_bounds = array<i64: 32, 24>}, {pipeline_mode = #tpu.pipeline_mode<synchronous>, transform_indices = @transform_4, window_bounds = array<i64: 24, 4>}, {pipeline_mode = #tpu.pipeline_mode<synchronous>, transform_indices = @transform_5, window_bounds = array<i64: 2, 2, 4>}, {pipeline_mode = #tpu.pipeline_mode<synchronous>, transform_indices = @transform_6, window_bounds = array<i64: 2, 4, 24>}, {pipeline_mode = #tpu.pipeline_mode<synchronous>, transform_indices = @transform_7, window_bounds = array<i64: 24, 4>}, {pipeline_mode = #tpu.pipeline_mode<synchronous>, transform_indices = @transform_8, window_bounds = array<i64: 24, 4>}, {pipeline_mode = #tpu.pipeline_mode<synchronous>, transform_indices = @transform_9, window_bounds = array<i64: 1, 4>}, {pipeline_mode = #tpu.pipeline_mode<synchronous>, transform_indices = @transform_10, window_bounds = array<i64: 2, 4>}]} {
    %c0 = arith.constant 0 : index
    %c0_0 = arith.constant 0 : index
    %0 = vector.load %arg1[%c0, %c0_0] : memref<32x160xf32, #tpu.memory_space<vmem>>, vector<32x160xf32>
    %c0_1 = arith.constant 0 : index
    %c0_2 = arith.constant 0 : index
    %1 = vector.load %arg2[%c0_1, %c0_2] : memref<160x24xf32, #tpu.memory_space<vmem>>, vector<160x24xf32>
    %cst = arith.constant dense<0.000000e+00> : vector<32x24xf32>
    %2 = tpu.matmul %0, %1, %cst {dimension_numbers = #tpu.dot_dimension_numbers<[1], [0], [0], [1], [0, 0, 1, 1], [], []>} : vector<32x160xf32>, vector<160x24xf32>, vector<32x24xf32> -> vector<32x24xf32>
    %c0_3 = arith.constant 0 : index
    %c0_4 = arith.constant 0 : index
    %3 = vector.load %arg4[%c0_3, %c0_4] : memref<32x24xf32, #tpu.memory_space<vmem>>, vector<32x24xf32>
    %4 = arith.addf %2, %3 : vector<32x24xf32>
    %5 = tpu.iota {dimensions = array<i32: 0>} : vector<2x1xi32>
    %cst_5 = arith.constant 0.000000e+00 : f32
    %6 = vector.broadcast %cst_5 : f32 to vector<2x24xf32>
    %7 = vector.extract_strided_slice %4 {offsets = [0, 0], sizes = [16, 24], strides = [1, 1]} : vector<32x24xf32> to vector<16x24xf32>
    %cst_6 = arith.constant dense<0xFF800000> : vector<24xf32>
    %8 = vector.multi_reduction <maximumf>, %7, %cst_6 [0] : vector<16x24xf32> to vector<24xf32>
    %9 = vector.shape_cast %8 : vector<24xf32> to vector<1x24xf32>
    %c0_i32 = arith.constant 0 : i32
    %10 = vector.broadcast %c0_i32 : i32 to vector<2x1xi32>
    %11 = arith.cmpi eq, %5, %10 : vector<2x1xi32>
    %cst_7 = arith.constant 0.000000e+00 : f32
    %12 = vector.shape_cast %11 : vector<2x1xi1> to vector<2x1xi1>
    %13 = vector.broadcast %12 : vector<2x1xi1> to vector<2x24xi1>
    %14 = vector.shape_cast %9 : vector<1x24xf32> to vector<1x24xf32>
    %15 = vector.broadcast %14 : vector<1x24xf32> to vector<2x24xf32>
    %16 = vector.broadcast %cst_7 : f32 to vector<2x24xf32>
    %17 = arith.select %13, %15, %16 : vector<2x24xi1>, vector<2x24xf32>
    %18 = arith.addf %6, %17 : vector<2x24xf32>
    %19 = vector.extract_strided_slice %4 {offsets = [16, 0], sizes = [16, 24], strides = [1, 1]} : vector<32x24xf32> to vector<16x24xf32>
    %cst_8 = arith.constant dense<0xFF800000> : vector<24xf32>
    %20 = vector.multi_reduction <maximumf>, %19, %cst_8 [0] : vector<16x24xf32> to vector<24xf32>
    %21 = vector.shape_cast %20 : vector<24xf32> to vector<1x24xf32>
    %c1_i32 = arith.constant 1 : i32
    %22 = vector.broadcast %c1_i32 : i32 to vector<2x1xi32>
    %23 = arith.cmpi eq, %5, %22 : vector<2x1xi32>
    %cst_9 = arith.constant 0.000000e+00 : f32
    %24 = vector.shape_cast %23 : vector<2x1xi1> to vector<2x1xi1>
    %25 = vector.broadcast %24 : vector<2x1xi1> to vector<2x24xi1>
    %26 = vector.shape_cast %21 : vector<1x24xf32> to vector<1x24xf32>
    %27 = vector.broadcast %26 : vector<1x24xf32> to vector<2x24xf32>
    %28 = vector.broadcast %cst_9 : f32 to vector<2x24xf32>
    %29 = arith.select %25, %27, %28 : vector<2x24xi1>, vector<2x24xf32>
    %30 = arith.addf %18, %29 : vector<2x24xf32>
    %c0_10 = arith.constant 0 : index
    %c0_11 = arith.constant 0 : index
    %31 = vector.load %arg3[%c0_10, %c0_11] : memref<1x24xf32, #tpu.memory_space<vmem>>, vector<1x24xf32>
    %32 = vector.broadcast %31 : vector<1x24xf32> to vector<2x24xf32>
    %33 = arith.addf %30, %32 : vector<2x24xf32>
    %cst_12 = arith.constant 0.000000e+00 : f32
    %34 = vector.broadcast %cst_12 : f32 to vector<2x24xf32>
    %35 = arith.maximumf %33, %34 : vector<2x24xf32>
    %c0_13 = arith.constant 0 : index
    %c0_14 = arith.constant 0 : index
    %36 = vector.load %arg5[%c0_13, %c0_14] : memref<24x4xf32, #tpu.memory_space<vmem>>, vector<24x4xf32>
    %cst_15 = arith.constant dense<0.000000e+00> : vector<2x4xf32>
    %37 = tpu.matmul %35, %36, %cst_15 {dimension_numbers = #tpu.dot_dimension_numbers<[1], [0], [0], [1], [0, 0, 1, 1], [], []>} : vector<2x24xf32>, vector<24x4xf32>, vector<2x4xf32> -> vector<2x4xf32>
    %38 = math.tanh %37 : vector<2x4xf32>
    %39 = math.exp %38 : vector<2x4xf32>
    %cst_16 = arith.constant dense<0.000000e+00> : vector<2xf32>
    %40 = vector.multi_reduction <add>, %39, %cst_16 [1] : vector<2x4xf32> to vector<2xf32>
    %41 = vector.shape_cast %40 : vector<2xf32> to vector<2x1xf32>
    %42 = vector.broadcast %41 : vector<2x1xf32> to vector<2x4xf32>
    %43 = arith.divf %39, %42 : vector<2x4xf32>
    %cst_17 = arith.constant 0.000000e+00 : f32
    %44 = vector.broadcast %cst_17 : f32 to vector<2x24xf32>
    %c0_18 = arith.constant 0 : index
    %c0_19 = arith.constant 0 : index
    %c0_20 = arith.constant 0 : index
    %45 = vector.load %arg6[%c0_18, %c0_19, %c0_20] : memref<2x2x4xf32, #tpu.memory_space<vmem>>, vector<1x2x4xf32>
    %46 = vector.shape_cast %45 : vector<1x2x4xf32> to vector<2x4xf32>
    %47 = vector.extract_strided_slice %43 {offsets = [0, 0], sizes = [1, 4], strides = [1, 1]} : vector<2x4xf32> to vector<1x4xf32>
    %48 = vector.broadcast %47 : vector<1x4xf32> to vector<2x4xf32>
    %49 = arith.mulf %46, %48 : vector<2x4xf32>
    %c0_21 = arith.constant 0 : index
    %c0_22 = arith.constant 0 : index
    %c0_23 = arith.constant 0 : index
    %50 = vector.load %arg7[%c0_21, %c0_22, %c0_23] : memref<2x4x24xf32, #tpu.memory_space<vmem>>, vector<1x4x24xf32>
    %51 = vector.shape_cast %50 : vector<1x4x24xf32> to vector<4x24xf32>
    %cst_24 = arith.constant dense<0.000000e+00> : vector<2x24xf32>
    %52 = tpu.matmul %49, %51, %cst_24 {dimension_numbers = #tpu.dot_dimension_numbers<[1], [0], [0], [1], [0, 0, 1, 1], [], []>} : vector<2x4xf32>, vector<4x24xf32>, vector<2x24xf32> -> vector<2x24xf32>
    %53 = arith.addf %44, %52 : vector<2x24xf32>
    %c1 = arith.constant 1 : index
    %c0_25 = arith.constant 0 : index
    %c0_26 = arith.constant 0 : index
    %54 = vector.load %arg6[%c1, %c0_25, %c0_26] : memref<2x2x4xf32, #tpu.memory_space<vmem>>, vector<1x2x4xf32>
    %55 = vector.shape_cast %54 : vector<1x2x4xf32> to vector<2x4xf32>
    %56 = vector.extract_strided_slice %43 {offsets = [1, 0], sizes = [1, 4], strides = [1, 1]} : vector<2x4xf32> to vector<1x4xf32>
    %57 = vector.broadcast %56 : vector<1x4xf32> to vector<2x4xf32>
    %58 = arith.mulf %55, %57 : vector<2x4xf32>
    %c1_27 = arith.constant 1 : index
    %c0_28 = arith.constant 0 : index
    %c0_29 = arith.constant 0 : index
    %59 = vector.load %arg7[%c1_27, %c0_28, %c0_29] : memref<2x4x24xf32, #tpu.memory_space<vmem>>, vector<1x4x24xf32>
    %60 = vector.shape_cast %59 : vector<1x4x24xf32> to vector<4x24xf32>
    %cst_30 = arith.constant dense<0.000000e+00> : vector<2x24xf32>
    %61 = tpu.matmul %58, %60, %cst_30 {dimension_numbers = #tpu.dot_dimension_numbers<[1], [0], [0], [1], [0, 0, 1, 1], [], []>} : vector<2x4xf32>, vector<4x24xf32>, vector<2x24xf32> -> vector<2x24xf32>
    %62 = arith.addf %53, %61 : vector<2x24xf32>
    %c0_31 = arith.constant 0 : index
    %c0_32 = arith.constant 0 : index
    %63 = vector.load %arg8[%c0_31, %c0_32] : memref<24x4xf32, #tpu.memory_space<vmem>>, vector<24x4xf32>
    %cst_33 = arith.constant dense<0.000000e+00> : vector<2x4xf32>
    %64 = tpu.matmul %35, %63, %cst_33 {dimension_numbers = #tpu.dot_dimension_numbers<[1], [0], [0], [1], [0, 0, 1, 1], [], []>} : vector<2x24xf32>, vector<24x4xf32>, vector<2x4xf32> -> vector<2x4xf32>
    %c0_34 = arith.constant 0 : index
    %c0_35 = arith.constant 0 : index
    %65 = vector.load %arg9[%c0_34, %c0_35] : memref<24x4xf32, #tpu.memory_space<vmem>>, vector<24x4xf32>
    %cst_36 = arith.constant dense<0.000000e+00> : vector<2x4xf32>
    %66 = tpu.matmul %62, %65, %cst_36 {dimension_numbers = #tpu.dot_dimension_numbers<[1], [0], [0], [1], [0, 0, 1, 1], [], []>} : vector<2x24xf32>, vector<24x4xf32>, vector<2x4xf32> -> vector<2x4xf32>
    %67 = arith.addf %64, %66 : vector<2x4xf32>
    %c0_37 = arith.constant 0 : index
    %c0_38 = arith.constant 0 : index
    %68 = vector.load %arg10[%c0_37, %c0_38] : memref<1x4xf32, #tpu.memory_space<vmem>>, vector<1x4xf32>
    %69 = vector.broadcast %68 : vector<1x4xf32> to vector<2x4xf32>
    %70 = arith.addf %67, %69 : vector<2x4xf32>
    %c0_39 = arith.constant 0 : index
    %c0_40 = arith.constant 0 : index
    %71 = vector.load %arg11[%c0_39, %c0_40] : memref<2x4xf32, #tpu.memory_space<vmem>>, vector<2x4xf32>
    tpu.vector_store %arg11[%c0_39, %c0_40], %70 {strides = array<i32>} : memref<2x4xf32, #tpu.memory_space<vmem>>, vector<2x4xf32>,
    return
  }
  func.func @transform_0(%arg0: i32) -> (i32, i32) {
    %c0_i32 = arith.constant 0 : i32
    %c0_i32_0 = arith.constant 0 : i32
    %c0_i32_1 = arith.constant 0 : i32
    return %c0_i32, %c0_i32_0 : i32, i32
  }
  func.func @transform_1(%arg0: i32) -> (i32, i32) {
    %c0_i32 = arith.constant 0 : i32
    %c0_i32_0 = arith.constant 0 : i32
    %c0_i32_1 = arith.constant 0 : i32
    return %c0_i32, %c0_i32_0 : i32, i32
  }
  func.func @transform_2(%arg0: i32) -> (i32, i32) {
    %c0_i32 = arith.constant 0 : i32
    %c0_i32_0 = arith.constant 0 : i32
    %c0_i32_1 = arith.constant 0 : i32
    return %c0_i32, %c0_i32_0 : i32, i32
  }
  func.func @transform_3(%arg0: i32) -> (i32, i32) {
    %c0_i32 = arith.constant 0 : i32
    %c0_i32_0 = arith.constant 0 : i32
    %c0_i32_1 = arith.constant 0 : i32
    return %c0_i32, %c0_i32_0 : i32, i32
  }
  func.func @transform_4(%arg0: i32) -> (i32, i32) {
    %c0_i32 = arith.constant 0 : i32
    %c0_i32_0 = arith.constant 0 : i32
    %c0_i32_1 = arith.constant 0 : i32
    return %c0_i32, %c0_i32_0 : i32, i32
  }
  func.func @transform_5(%arg0: i32) -> (i32, i32, i32) {
    %c0_i32 = arith.constant 0 : i32
    %c0_i32_0 = arith.constant 0 : i32
    %c0_i32_1 = arith.constant 0 : i32
    %c0_i32_2 = arith.constant 0 : i32
    return %c0_i32, %c0_i32_0, %c0_i32_1 : i32, i32, i32
  }
  func.func @transform_6(%arg0: i32) -> (i32, i32, i32) {
    %c0_i32 = arith.constant 0 : i32
    %c0_i32_0 = arith.constant 0 : i32
    %c0_i32_1 = arith.constant 0 : i32
    %c0_i32_2 = arith.constant 0 : i32
    return %c0_i32, %c0_i32_0, %c0_i32_1 : i32, i32, i32
  }
  func.func @transform_7(%arg0: i32) -> (i32, i32) {
    %c0_i32 = arith.constant 0 : i32
    %c0_i32_0 = arith.constant 0 : i32
    %c0_i32_1 = arith.constant 0 : i32
    return %c0_i32, %c0_i32_0 : i32, i32
  }
  func.func @transform_8(%arg0: i32) -> (i32, i32) {
    %c0_i32 = arith.constant 0 : i32
    %c0_i32_0 = arith.constant 0 : i32
    %c0_i32_1 = arith.constant 0 : i32
    return %c0_i32, %c0_i32_0 : i32, i32
  }
  func.func @transform_9(%arg0: i32) -> (i32, i32) {
    %c0_i32 = arith.constant 0 : i32
    %c0_i32_0 = arith.constant 0 : i32
    %c0_i32_1 = arith.constant 0 : i32
    return %c0_i32, %c0_i32_0 : i32, i32
  }
  func.func @transform_10(%arg0: i32) -> (i32, i32) {
    %c0_i32 = arith.constant 0 : i32
    %c0_i32_0 = arith.constant 0 : i32
    %c0_i32_1 = arith.constant 0 : i32
    return %c0_i32, %c0_i32_0 : i32, i32
  }
}

</mosaic_0001>

<llo_original>
// kernel: cnn_text_forward.1
$region0: #{cnn_text_forward.1}
  #allocation0 [shape = 'u32[]', space=smem, size = 0x4, offset = 0x4, fixed_abs, tag = 'smem constant byte address 0x4 - core index']
  #allocation1 [shape = 'u32[144,128]{1,0:T(1,128)}', space=vmem, size = 0x12000, scoped, tag = 'internal scratch']
  %s0 = inlined_call_operand.vmem [shape: f32[32,160], index: 0, kind: input, shape index: {}]
  %s1 = inlined_call_operand.vmem [shape: f32[160,24], index: 1, kind: input, shape index: {}]
  %s2 = inlined_call_operand.vmem [shape: f32[1,24], index: 2, kind: input, shape index: {}]
  %s3 = inlined_call_operand.vmem [shape: f32[32,24], index: 3, kind: input, shape index: {}]
  %s4 = inlined_call_operand.vmem [shape: f32[24,4], index: 4, kind: input, shape index: {}]
  %s5 = inlined_call_operand.vmem [shape: f32[2,2,4], index: 5, kind: input, shape index: {}]
  %s6 = inlined_call_operand.vmem [shape: f32[2,4,24], index: 6, kind: input, shape index: {}]
  %s7 = inlined_call_operand.vmem [shape: f32[24,4], index: 7, kind: input, shape index: {}]
  %s8 = inlined_call_operand.vmem [shape: f32[24,4], index: 8, kind: input, shape index: {}]
  %s9 = inlined_call_operand.vmem [shape: f32[1,4], index: 9, kind: input, shape index: {}]
  %s10 = inlined_call_operand.hbm [shape: f32[2,4], index: 10, kind: output, shape index: {}]
  %s11 = sld [smem:[#allocation0]]
  $region50: #{cnn_text_forward.1} parent=0
    _
  %s13 = ssub.s32 1, %s11
  %s14 = scalar_select 0, %s13, %s11
  $region1: #{cnn_text_forward.1} parent=0
    #allocation2 [shape = 'u8[1024]{0}', space=vmem, size = 0x400, scoped, tag = 'output window, operand 0, single buffered']
    #allocation3 [shape = 's32[1]{0}', space=sflag, size = 0x4, scoped, tag = 'scoped memory for cnn_text_forward.1']
    %15 = vsyncpa [#allocation3], 0
    // Predicated region
    $region2: #{cnn_text_forward.1} parent=1 // pred_check
      _
    $region3: #{cnn_text_forward.1} parent=1 // pred_check_branch
      %17 = sbr.rel (0) target = $region5
    $region4: #{cnn_text_forward.1} parent=1 // pred_region
      _
    $region5: #{cnn_text_forward.1} parent=1 // pred_fallthru
      _
    // Predicated region
    $region6: #{cnn_text_forward.1} parent=1 // pred_check
      _
    $region7: #{cnn_text_forward.1} parent=1 // pred_check_branch
      %19 = sbr.rel (0) target = $region9
    $region8: #{cnn_text_forward.1} parent=1 // pred_region
      _
    $region9: #{cnn_text_forward.1} parent=1 // pred_fallthru
      _
    // Predicated region
    $region10: #{cnn_text_forward.1} parent=1 // pred_check
      _
    $region11: #{cnn_text_forward.1} parent=1 // pred_check_branch
      %21 = sbr.rel (0) target = $region13
    $region12: #{cnn_text_forward.1} parent=1 // pred_region
      _
    $region13: #{cnn_text_forward.1} parent=1 // pred_fallthru
      _
    // Predicated region
    $region14: #{cnn_text_forward.1} parent=1 // pred_check
      _
    $region15: #{cnn_text_forward.1} parent=1 // pred_check_branch
      %23 = sbr.rel (0) target = $region17
    $region16: #{cnn_text_forward.1} parent=1 // pred_region
      _
    $region17: #{cnn_text_forward.1} parent=1 // pred_fallthru
      _
    // Predicated region
    $region18: #{cnn_text_forward.1} parent=1 // pred_check
      _
    $region19: #{cnn_text_forward.1} parent=1 // pred_check_branch
      %25 = sbr.rel (0) target = $region21
    $region20: #{cnn_text_forward.1} parent=1 // pred_region
      _
    $region21: #{cnn_text_forward.1} parent=1 // pred_fallthru
      _
    // Predicated region
    $region22: #{cnn_text_forward.1} parent=1 // pred_check
      _
    $region23: #{cnn_text_forward.1} parent=1 // pred_check_branch
      %27 = sbr.rel (0) target = $region25
    $region24: #{cnn_text_forward.1} parent=1 // pred_region
      _
    $region25: #{cnn_text_forward.1} parent=1 // pred_fallthru
      _
    // Predicated region
    $region26: #{cnn_text_forward.1} parent=1 // pred_check
      _
    $region27: #{cnn_text_forward.1} parent=1 // pred_check_branch
      %29 = sbr.rel (0) target = $region29
    $region28: #{cnn_text_forward.1} parent=1 // pred_region
      _
    $region29: #{cnn_text_forward.1} parent=1 // pred_fallthru
      _
    // Predicated region
    $region30: #{cnn_text_forward.1} parent=1 // pred_check
      _
    $region31: #{cnn_text_forward.1} parent=1 // pred_check_branch
      %31 = sbr.rel (0) target = $region33
    $region32: #{cnn_text_forward.1} parent=1 // pred_region
      _
    $region33: #{cnn_text_forward.1} parent=1 // pred_fallthru
      _
    // Predicated region
    $region34: #{cnn_text_forward.1} parent=1 // pred_check
      _
    $region35: #{cnn_text_forward.1} parent=1 // pred_check_branch
      %33 = sbr.rel (0) target = $region37
    $region36: #{cnn_text_forward.1} parent=1 // pred_region
      _
    $region37: #{cnn_text_forward.1} parent=1 // pred_fallthru
      _
    // Predicated region
    $region38: #{cnn_text_forward.1} parent=1 // pred_check
      _
    $region39: #{cnn_text_forward.1} parent=1 // pred_check_branch
      %35 = sbr.rel (0) target = $region41
    $region40: #{cnn_text_forward.1} parent=1 // pred_region
      _
    $region41: #{cnn_text_forward.1} parent=1 // pred_fallthru
      _
    %v36 = vld [vmem:[%s0] sm:$0xff]
    %v37 = vld [vmem:[%s0 + $0x8] sm:$0xff]
    %v38 = vld [vmem:[%s0 + $0x10] sm:$0xff]
    %v39 = vld [vmem:[%s0 + $0x18] sm:$0xff]
    %v40 = vld [vmem:[%s0 + $0x20] sm:$0xff]
    %v41 = vld [vmem:[%s0 + $0x28] sm:$0xff]
    %v42 = vld [vmem:[%s0 + $0x30] sm:$0xff]
    %v43 = vld [vmem:[%s0 + $0x38] sm:$0xff]
    %v44 = vld [vmem:[%s1] sm:$0xff]
    %v45 = vld [vmem:[%s1 + $0x8] sm:$0xff]
    %v46 = vld [vmem:[%s1 + $0x10] sm:$0xff]
    %v47 = vld [vmem:[%s1 + $0x18] sm:$0xff]
    %v48 = vld [vmem:[%s1 + $0x20] sm:$0xff]
    %v49 = vld [vmem:[%s1 + $0x28] sm:$0xff]
    %v50 = vld [vmem:[%s1 + $0x30] sm:$0xff]
    %v51 = vld [vmem:[%s1 + $0x38] sm:$0xff]
    %v52 = vld [vmem:[%s1 + $0x40] sm:$0xff]
    %v53 = vld [vmem:[%s1 + $0x48] sm:$0xff]
    %v54 = vld [vmem:[%s1 + $0x50] sm:$0xff]
    %v55 = vld [vmem:[%s1 + $0x58] sm:$0xff]
    %v56 = vld [vmem:[%s1 + $0x60] sm:$0xff]
    %v57 = vld [vmem:[%s1 + $0x68] sm:$0xff]
    %v58 = vld [vmem:[%s1 + $0x70] sm:$0xff]
    %v59 = vld [vmem:[%s1 + $0x78] sm:$0xff]
    %v60 = vld [vmem:[%s1 + $0x80] sm:$0xff]
    %v61 = vld [vmem:[%s1 + $0x88] sm:$0xff]
    %v62 = vld [vmem:[%s1 + $0x90] sm:$0xff]
    %v63 = vld [vmem:[%s1 + $0x98] sm:$0xff]
    %v64 = vld [vmem:[%s3] sm:$0xff]
    %v65 = vld [vmem:[%s3 + $0x8] sm:$0xff]
    %v66 = vld [vmem:[%s3 + $0x10] sm:$0xff]
    %v67 = vld [vmem:[%s3 + $0x18] sm:$0xff]
    %vm68 = vcmask 261120
    %v70 = vsel %vm68, %v37, 0
    %v73 = vsel %vm68, %v39, 0
    %v76 = vsel %vm68, %v41, 0
    %v79 = vsel %vm68, %v43, 0
    %81 = vmatprep.subr.mxu0 0.0
    %82 = vmatpush1.msra.mxu0 %v59
    %83 = vmatprep.subr.mxu0 0.0
    %84 = vmatpush1.msra.mxu0 %v58
    %85 = vmatprep.subr.mxu0 0.0
    %86 = vmatpush1.msra.mxu0 %v57
    %87 = vmatprep.subr.mxu0 0.0
    %88 = vmatpush1.msra.mxu0 %v56
    %89 = vmatprep.subr.mxu0 0.0
    %90 = vmatpush1.msra.mxu0 %v55
    %91 = vmatprep.subr.mxu0 0.0
    %92 = vmatpush1.msra.mxu0 %v54
    %93 = vmatprep.subr.mxu0 0.0
    %94 = vmatpush1.msra.mxu0 %v53
    %95 = vmatprep.subr.mxu0 0.0
    %96 = vmatpush1.msra.mxu0 %v52
    %97 = vmatprep.subr.mxu0 0.0
    %98 = vmatpush1.msra.mxu0 %v51
    %99 = vmatprep.subr.mxu0 0.0
    %100 = vmatpush1.msra.mxu0 %v50
    %101 = vmatprep.subr.mxu0 0.0
    %102 = vmatpush1.msra.mxu0 %v49
    %103 = vmatprep.subr.mxu0 0.0
    %104 = vmatpush1.msra.mxu0 %v48
    %105 = vmatprep.subr.mxu0 0.0
    %106 = vmatpush1.msra.mxu0 %v47
    %107 = vmatprep.subr.mxu0 0.0
    %108 = vmatpush1.msra.mxu0 %v46
    %109 = vmatprep.subr.mxu0 0.0
    %110 = vmatpush1.msra.mxu0 %v45
    %111 = vmatprep.subr.mxu0 0.0
    %112 = vmatpush1.msra.mxu0 %v44
    %113 = vmatprep.subr.mxu0 0.0
    %114 = vmatpush2.msra.mxu0 0.0
    %115 = vmatprep.subr.mxu0 0.0
    %116 = vmatpush2.msra.mxu0 0.0
    %117 = vmatprep.subr.mxu0 0.0
    %118 = vmatpush2.msra.mxu0 0.0
    %119 = vmatprep.subr.mxu0 0.0
    %120 = vmatpush2.msra.mxu0 0.0
    %121 = vmatprep.subr.mxu0 0.0
    %122 = vmatpush2.msra.mxu0 0.0
    %123 = vmatprep.subr.mxu0 0.0
    %124 = vmatpush2.msra.mxu0 0.0
    %125 = vmatprep.subr.mxu0 0.0
    %126 = vmatpush2.msra.mxu0 0.0
    %127 = vmatprep.subr.mxu0 0.0
    %128 = vmatpush2.msra.mxu0 0.0
    %129 = vmatprep.subr.mxu0 0.0
    %130 = vmatpush2.msra.mxu0 0.0
    %131 = vmatprep.subr.mxu0 0.0
    %132 = vmatpush2.msra.mxu0 0.0
    %133 = vmatprep.subr.mxu0 0.0
    %134 = vmatpush2.msra.mxu0 0.0
    %135 = vmatprep.subr.mxu0 0.0
    %136 = vmatpush2.msra.mxu0 0.0
    %137 = vmatprep.subr.mxu0 0.0
    %138 = vmatpush2.msra.mxu0 %v63
    %139 = vmatprep.subr.mxu0 0.0
    %140 = vmatpush2.msra.mxu0 %v62
    %141 = vmatprep.subr.mxu0 0.0
    %142 = vmatpush2.msra.mxu0 %v61
    %143 = vmatprep.subr.mxu0 0.0
    %144 = vmatpush2.msra.mxu0 %v60
    %145 = vmatprep.mubr.f32.mxu0 %v70
    %146 = vmatmul.mubr.f32.gmra.mxu0 %v36
    %v147 = vpop.f32.mrf.mxu0
    %v148 = vadd.f32 %v64, %v147
    %v149 = vpop.f32.mrf.mxu0
    %150 = vmatprep.mubr.f32.mxu0 %v73
    %151 = vmatmul.mubr.f32.gmra.mxu0 %v38
    %v152 = vpop.f32.mrf.mxu0
    %v153 = vadd.f32 %v65, %v152
    %v154 = vpop.f32.mrf.mxu0
    %155 = vmatprep.mubr.f32.mxu0 %v76
    %156 = vmatmul.mubr.f32.gmra.mxu0 %v40
    %v157 = vpop.f32.mrf.mxu0
    %v158 = vadd.f32 %v66, %v157
    %v159 = vpop.f32.mrf.mxu0
    %160 = vmatprep.mubr.f32.mxu0 %v79
    %161 = vmatmul.mubr.f32.gmra.mxu0 %v42
    %v162 = vpop.f32.mrf.mxu0
    %v163 = vadd.f32 %v67, %v162
    %v164 = vpop.f32.mrf.mxu0
    %165 = vdwg.mxu0
    %v166 = vlaneseq
    %v167 = vshrl.u32 %v166, 7
    %vm168 = vcmask 195584
    %v169 = vsel %vm168, %v148, -inf
    %v170 = vsel %vm168, %v153, -inf
    %v171 = vmax.f32 %v169, %v170
    %v172 = vrot.slane %v171, 4
    %v173 = vmax.f32 %v171, %v172
    %v174 = vrot.slane %v173, 2
    %v175 = vmax.f32 %v173, %v174
    %v176 = vrot.slane %v175, 1
    %v177 = vmax.f32 %v175, %v176
    %vm178 = vcmp.eq.s32.totalorder %v167, 0
    %v179 = vsel %vm178, 1, 0
    %vm180 = vcmp.eq.s32.totalorder %v179, 1
    %v181 = vsel %vm180, %v177, 0.0
    %v182 = vadd.f32 %v181, 0.0
    %v183 = vsel %vm168, %v158, -inf
    %v184 = vsel %vm168, %v163, -inf
    %v185 = vmax.f32 %v183, %v184
    %v186 = vrot.slane %v185, 4
    %v187 = vmax.f32 %v185, %v186
    %v188 = vrot.slane %v187, 2
    %v189 = vmax.f32 %v187, %v188
    %v190 = vrot.slane %v189, 1
    %v191 = vmax.f32 %v189, %v190
    %vm192 = vcmp.eq.s32.totalorder %v167, 1
    %v193 = vsel %vm192, 1, 0
    %vm194 = vcmp.eq.s32.totalorder %v193, 1
    %v195 = vsel %vm194, %v191, 0.0
    %v196 = vadd.f32 %v182, %v195
    %v197 = vld [vmem:[%s2] sm:$0x1]
    %v199 = vlaneseq
    %v200 = vshrl.u32 %v199, 7
    %v201 = vsub.s32 0, %v200
    %v202 = vrot.slane %v197, %v201
    %v204 = vadd.f32 %v196, %v202
    %v205 = vmax.f32 %v204, 0.0
    %v206 = vld [vmem:[%s4] sm:$0xff]
    %v207 = vld [vmem:[%s4 + $0x8] sm:$0xff]
    %v208 = vld [vmem:[%s4 + $0x10] sm:$0xff]
    %v210 = vsel %vm168, %v205, 0
    %212 = vmatprep.subr.mxu0 0.0
    %213 = vmatpush1.msra.mxu0 0.0
    %214 = vmatprep.subr.mxu0 0.0
    %215 = vmatpush1.msra.mxu0 0.0
    %216 = vmatprep.subr.mxu0 0.0
    %217 = vmatpush1.msra.mxu0 0.0
    %218 = vmatprep.subr.mxu0 0.0
    %219 = vmatpush1.msra.mxu0 0.0
    %220 = vmatprep.subr.mxu0 0.0
    %221 = vmatpush1.msra.mxu0 0.0
    %222 = vmatprep.subr.mxu0 0.0
    %223 = vmatpush1.msra.mxu0 0.0
    %224 = vmatprep.subr.mxu0 0.0
    %225 = vmatpush1.msra.mxu0 0.0
    %226 = vmatprep.subr.mxu0 0.0
    %227 = vmatpush1.msra.mxu0 0.0
    %228 = vmatprep.subr.mxu0 0.0
    %229 = vmatpush1.msra.mxu0 0.0
    %230 = vmatprep.subr.mxu0 0.0
    %231 = vmatpush1.msra.mxu0 0.0
    %232 = vmatprep.subr.mxu0 0.0
    %233 = vmatpush1.msra.mxu0 0.0
    %234 = vmatprep.subr.mxu0 0.0
    %235 = vmatpush1.msra.mxu0 0.0
    %236 = vmatprep.subr.mxu0 0.0
    %237 = vmatpush1.msra.mxu0 0.0
    %238 = vmatprep.subr.mxu0 0.0
    %239 = vmatpush1.msra.mxu0 %v208
    %240 = vmatprep.subr.mxu0 0.0
    %241 = vmatpush1.msra.mxu0 %v207
    %242 = vmatprep.subr.mxu0 0.0
    %243 = vmatpush1.msra.mxu0 %v206
    %244 = vmatprep.subr.mxu0 0.0
    %245 = vmatpush2.msra.mxu0 0.0
    %246 = vmatprep.subr.mxu0 0.0
    %247 = vmatpush2.msra.mxu0 0.0
    %248 = vmatprep.subr.mxu0 0.0
    %249 = vmatpush2.msra.mxu0 0.0
    %250 = vmatprep.subr.mxu0 0.0
    %251 = vmatpush2.msra.mxu0 0.0
    %252 = vmatprep.subr.mxu0 0.0
    %253 = vmatpush2.msra.mxu0 0.0
    %254 = vmatprep.subr.mxu0 0.0
    %255 = vmatpush2.msra.mxu0 0.0
    %256 = vmatprep.subr.mxu0 0.0
    %257 = vmatpush2.msra.mxu0 0.0
    %258 = vmatprep.subr.mxu0 0.0
    %259 = vmatpush2.msra.mxu0 0.0
    %260 = vmatprep.subr.mxu0 0.0
    %261 = vmatpush2.msra.mxu0 0.0
    %262 = vmatprep.subr.mxu0 0.0
    %263 = vmatpush2.msra.mxu0 0.0
    %264 = vmatprep.subr.mxu0 0.0
    %265 = vmatpush2.msra.mxu0 0.0
    %266 = vmatprep.subr.mxu0 0.0
    %267 = vmatpush2.msra.mxu0 0.0
    %268 = vmatprep.subr.mxu0 0.0
    %269 = vmatpush2.msra.mxu0 0.0
    %270 = vmatprep.subr.mxu0 0.0
    %271 = vmatpush2.msra.mxu0 0.0
    %272 = vmatprep.subr.mxu0 0.0
    %273 = vmatpush2.msra.mxu0 0.0
    %274 = vmatprep.subr.mxu0 0.0
    %275 = vmatpush2.msra.mxu0 0.0
    %276 = vmatprep.mubr.f32.mxu0 0.0
    %277 = vmatmul.mubr.f32.gmra.mxu0 %v210
    %v278 = vpop.f32.mrf.mxu0
    %v279 = vadd.f32 0.0, %v278
    %v280 = vpop.f32.mrf.mxu0
    %281 = vdwg.mxu0
    %v282 = vtanh.pop %v279
    %v283 = vmul.f32 %v282, 1.442695
    %v284 = vpow.pop %v283
    %vm285 = vcmask 25600
    %v286 = vsel %vm285, %v284, 0.0
    %287 = vadd.xlane.f32.xlu0 %v286
    %v288 = vpop.xlane.xlu0 %287
    %v289 = vrcp.pop %v288
    %v290 = vmul.f32 %v284, %v289
    %v291 = vld [vmem:[%s5] sm:$0x3]
    %v292 = vlaneseq
    %v293 = vshrl.u32 %v292, 7
    %v294 = vsub.s32 0, %v293
    %v295 = vrot.slane %v290, %v294
    %v296 = vmul.f32 %v291, %v295
    %v297 = vld [vmem:[%s6] sm:$0xf]
    %s298 = scalar_lea.vmem %s5, 2
    %v299 = vld [vmem:[%s298] sm:$0x3]
    %v300 = vlaneseq
    %v301 = vshrl.u32 %v300, 7
    %v302 = vsub.s32 1, %v301
    %v303 = vrot.slane %v290, %v302
    %v304 = vmul.f32 %v299, %v303
    %s305 = scalar_lea.vmem %s6, 4
    %v306 = vld [vmem:[%s305] sm:$0xf]
    %vm307 = vcmask 31744
    %v309 = vsel %vm307, %v304, 0
    %vm311 = vcmask 1043456
    %v313 = vsel %vm311, %v306, 0
    %315 = vmatprep.subr.mxu0 0.0
    %316 = vmatpush1.msra.mxu0 0.0
    %317 = vmatprep.subr.mxu0 0.0
    %318 = vmatpush1.msra.mxu0 0.0
    %319 = vmatprep.subr.mxu0 0.0
    %320 = vmatpush1.msra.mxu0 0.0
    %321 = vmatprep.subr.mxu0 0.0
    %322 = vmatpush1.msra.mxu0 0.0
    %323 = vmatprep.subr.mxu0 0.0
    %324 = vmatpush1.msra.mxu0 0.0
    %325 = vmatprep.subr.mxu0 0.0
    %326 = vmatpush1.msra.mxu0 0.0
    %327 = vmatprep.subr.mxu0 0.0
    %328 = vmatpush1.msra.mxu0 0.0
    %329 = vmatprep.subr.mxu0 0.0
    %330 = vmatpush1.msra.mxu0 0.0
    %331 = vmatprep.subr.mxu0 0.0
    %332 = vmatpush1.msra.mxu0 0.0
    %333 = vmatprep.subr.mxu0 0.0
    %334 = vmatpush1.msra.mxu0 0.0
    %335 = vmatprep.subr.mxu0 0.0
    %336 = vmatpush1.msra.mxu0 0.0
    %337 = vmatprep.subr.mxu0 0.0
    %338 = vmatpush1.msra.mxu0 0.0
    %339 = vmatprep.subr.mxu0 0.0
    %340 = vmatpush1.msra.mxu0 0.0
    %341 = vmatprep.subr.mxu0 0.0
    %342 = vmatpush1.msra.mxu0 0.0
    %343 = vmatprep.subr.mxu0 0.0
    %344 = vmatpush1.msra.mxu0 0.0
    %345 = vmatprep.subr.mxu0 0.0
    %346 = vmatpush1.msra.mxu0 %v313
    %347 = vmatprep.subr.mxu0 0.0
    %348 = vmatpush2.msra.mxu0 0.0
    %349 = vmatprep.subr.mxu0 0.0
    %350 = vmatpush2.msra.mxu0 0.0
    %351 = vmatprep.subr.mxu0 0.0
    %352 = vmatpush2.msra.mxu0 0.0
    %353 = vmatprep.subr.mxu0 0.0
    %354 = vmatpush2.msra.mxu0 0.0
    %355 = vmatprep.subr.mxu0 0.0
    %356 = vmatpush2.msra.mxu0 0.0
    %357 = vmatprep.subr.mxu0 0.0
    %358 = vmatpush2.msra.mxu0 0.0
    %359 = vmatprep.subr.mxu0 0.0
    %360 = vmatpush2.msra.mxu0 0.0
    %361 = vmatprep.subr.mxu0 0.0
    %362 = vmatpush2.msra.mxu0 0.0
    %363 = vmatprep.subr.mxu0 0.0
    %364 = vmatpush2.msra.mxu0 0.0
    %365 = vmatprep.subr.mxu0 0.0
    %366 = vmatpush2.msra.mxu0 0.0
    %367 = vmatprep.subr.mxu0 0.0
    %368 = vmatpush2.msra.mxu0 0.0
    %369 = vmatprep.subr.mxu0 0.0
    %370 = vmatpush2.msra.mxu0 0.0
    %371 = vmatprep.subr.mxu0 0.0
    %372 = vmatpush2.msra.mxu0 0.0
    %373 = vmatprep.subr.mxu0 0.0
    %374 = vmatpush2.msra.mxu0 0.0
    %375 = vmatprep.subr.mxu0 0.0
    %376 = vmatpush2.msra.mxu0 0.0
    %377 = vmatprep.subr.mxu0 0.0
    %378 = vmatpush2.msra.mxu0 0.0
    %379 = vmatprep.mubr.f32.mxu0 0.0
    %380 = vmatmul.mubr.f32.gmra.mxu0 %v309
    %v381 = vpop.f32.mrf.mxu0
    %v382 = vadd.f32 0.0, %v381
    %v383 = vpop.f32.mrf.mxu0
    %384 = vdwg.mxu0
    %v386 = vsel %vm307, %v296, 0
    %v389 = vsel %vm311, %v297, 0
    %391 = vmatprep.subr.mxu0 0.0
    %392 = vmatpush1.msra.mxu0 0.0
    %393 = vmatprep.subr.mxu0 0.0
    %394 = vmatpush1.msra.mxu0 0.0
    %395 = vmatprep.subr.mxu0 0.0
    %396 = vmatpush1.msra.mxu0 0.0
    %397 = vmatprep.subr.mxu0 0.0
    %398 = vmatpush1.msra.mxu0 0.0
    %399 = vmatprep.subr.mxu0 0.0
    %400 = vmatpush1.msra.mxu0 0.0
    %401 = vmatprep.subr.mxu0 0.0
    %402 = vmatpush1.msra.mxu0 0.0
    %403 = vmatprep.subr.mxu0 0.0
    %404 = vmatpush1.msra.mxu0 0.0
    %405 = vmatprep.subr.mxu0 0.0
    %406 = vmatpush1.msra.mxu0 0.0
    %407 = vmatprep.subr.mxu0 0.0
    %408 = vmatpush1.msra.mxu0 0.0
    %409 = vmatprep.subr.mxu0 0.0
    %410 = vmatpush1.msra.mxu0 0.0
    %411 = vmatprep.subr.mxu0 0.0
    %412 = vmatpush1.msra.mxu0 0.0
    %413 = vmatprep.subr.mxu0 0.0
    %414 = vmatpush1.msra.mxu0 0.0
    %415 = vmatprep.subr.mxu0 0.0
    %416 = vmatpush1.msra.mxu0 0.0
    %417 = vmatprep.subr.mxu0 0.0
    %418 = vmatpush1.msra.mxu0 0.0
    %419 = vmatprep.subr.mxu0 0.0
    %420 = vmatpush1.msra.mxu0 0.0
    %421 = vmatprep.subr.mxu0 0.0
    %422 = vmatpush1.msra.mxu0 %v389
    %423 = vmatprep.subr.mxu0 0.0
    %424 = vmatpush2.msra.mxu0 0.0
    %425 = vmatprep.subr.mxu0 0.0
    %426 = vmatpush2.msra.mxu0 0.0
    %427 = vmatprep.subr.mxu0 0.0
    %428 = vmatpush2.msra.mxu0 0.0
    %429 = vmatprep.subr.mxu0 0.0
    %430 = vmatpush2.msra.mxu0 0.0
    %431 = vmatprep.subr.mxu0 0.0
    %432 = vmatpush2.msra.mxu0 0.0
    %433 = vmatprep.subr.mxu0 0.0
    %434 = vmatpush2.msra.mxu0 0.0
    %435 = vmatprep.subr.mxu0 0.0
    %436 = vmatpush2.msra.mxu0 0.0
    %437 = vmatprep.subr.mxu0 0.0
    %438 = vmatpush2.msra.mxu0 0.0
    %439 = vmatprep.subr.mxu0 0.0
    %440 = vmatpush2.msra.mxu0 0.0
    %441 = vmatprep.subr.mxu0 0.0
    %442 = vmatpush2.msra.mxu0 0.0
    %443 = vmatprep.subr.mxu0 0.0
    %444 = vmatpush2.msra.mxu0 0.0
    %445 = vmatprep.subr.mxu0 0.0
    %446 = vmatpush2.msra.mxu0 0.0
    %447 = vmatprep.subr.mxu0 0.0
    %448 = vmatpush2.msra.mxu0 0.0
    %449 = vmatprep.subr.mxu0 0.0
    %450 = vmatpush2.msra.mxu0 0.0
    %451 = vmatprep.subr.mxu0 0.0
    %452 = vmatpush2.msra.mxu0 0.0
    %453 = vmatprep.subr.mxu0 0.0
    %454 = vmatpush2.msra.mxu0 0.0
    %455 = vmatprep.mubr.f32.mxu0 0.0
    %456 = vmatmul.mubr.f32.gmra.mxu0 %v386
    %v457 = vpop.f32.mrf.mxu0
    %v458 = vadd.f32 %v382, %v457
    %v459 = vpop.f32.mrf.mxu0
    %460 = vdwg.mxu0
    %v461 = vld [vmem:[%s7] sm:$0xff]
    %v462 = vld [vmem:[%s7 + $0x8] sm:$0xff]
    %v463 = vld [vmem:[%s7 + $0x10] sm:$0xff]
    %v464 = vld [vmem:[%s8] sm:$0xff]
    %v465 = vld [vmem:[%s8 + $0x8] sm:$0xff]
    %v466 = vld [vmem:[%s8 + $0x10] sm:$0xff]
    %v468 = vsel %vm168, %v458, 0
    %470 = vmatprep.subr.mxu0 0.0
    %471 = vmatpush1.msra.mxu0 0.0
    %472 = vmatprep.subr.mxu0 0.0
    %473 = vmatpush1.msra.mxu0 0.0
    %474 = vmatprep.subr.mxu0 0.0
    %475 = vmatpush1.msra.mxu0 0.0
    %476 = vmatprep.subr.mxu0 0.0
    %477 = vmatpush1.msra.mxu0 0.0
    %478 = vmatprep.subr.mxu0 0.0
    %479 = vmatpush1.msra.mxu0 0.0
    %480 = vmatprep.subr.mxu0 0.0
    %481 = vmatpush1.msra.mxu0 0.0
    %482 = vmatprep.subr.mxu0 0.0
    %483 = vmatpush1.msra.mxu0 0.0
    %484 = vmatprep.subr.mxu0 0.0
    %485 = vmatpush1.msra.mxu0 0.0
    %486 = vmatprep.subr.mxu0 0.0
    %487 = vmatpush1.msra.mxu0 0.0
    %488 = vmatprep.subr.mxu0 0.0
    %489 = vmatpush1.msra.mxu0 0.0
    %490 = vmatprep.subr.mxu0 0.0
    %491 = vmatpush1.msra.mxu0 0.0
    %492 = vmatprep.subr.mxu0 0.0
    %493 = vmatpush1.msra.mxu0 0.0
    %494 = vmatprep.subr.mxu0 0.0
    %495 = vmatpush1.msra.mxu0 0.0
    %496 = vmatprep.subr.mxu0 0.0
    %497 = vmatpush1.msra.mxu0 %v466
    %498 = vmatprep.subr.mxu0 0.0
    %499 = vmatpush1.msra.mxu0 %v465
    %500 = vmatprep.subr.mxu0 0.0
    %501 = vmatpush1.msra.mxu0 %v464
    %502 = vmatprep.subr.mxu0 0.0
    %503 = vmatpush2.msra.mxu0 0.0
    %504 = vmatprep.subr.mxu0 0.0
    %505 = vmatpush2.msra.mxu0 0.0
    %506 = vmatprep.subr.mxu0 0.0
    %507 = vmatpush2.msra.mxu0 0.0
    %508 = vmatprep.subr.mxu0 0.0
    %509 = vmatpush2.msra.mxu0 0.0
    %510 = vmatprep.subr.mxu0 0.0
    %511 = vmatpush2.msra.mxu0 0.0
    %512 = vmatprep.subr.mxu0 0.0
    %513 = vmatpush2.msra.mxu0 0.0
    %514 = vmatprep.subr.mxu0 0.0
    %515 = vmatpush2.msra.mxu0 0.0
    %516 = vmatprep.subr.mxu0 0.0
    %517 = vmatpush2.msra.mxu0 0.0
    %518 = vmatprep.subr.mxu0 0.0
    %519 = vmatpush2.msra.mxu0 0.0
    %520 = vmatprep.subr.mxu0 0.0
    %521 = vmatpush2.msra.mxu0 0.0
    %522 = vmatprep.subr.mxu0 0.0
    %523 = vmatpush2.msra.mxu0 0.0
    %524 = vmatprep.subr.mxu0 0.0
    %525 = vmatpush2.msra.mxu0 0.0
    %526 = vmatprep.subr.mxu0 0.0
    %527 = vmatpush2.msra.mxu0 0.0
    %528 = vmatprep.subr.mxu0 0.0
    %529 = vmatpush2.msra.mxu0 0.0
    %530 = vmatprep.subr.mxu0 0.0
    %531 = vmatpush2.msra.mxu0 0.0
    %532 = vmatprep.subr.mxu0 0.0
    %533 = vmatpush2.msra.mxu0 0.0
    %534 = vmatprep.mubr.f32.mxu0 0.0
    %535 = vmatmul.mubr.f32.gmra.mxu0 %v468
    %v536 = vpop.f32.mrf.mxu0
    %v537 = vadd.f32 0.0, %v536
    %v538 = vpop.f32.mrf.mxu0
    %539 = vdwg.mxu0
    %540 = vmatprep.subr.mxu0 0.0
    %541 = vmatpush1.msra.mxu0 0.0
    %542 = vmatprep.subr.mxu0 0.0
    %543 = vmatpush1.msra.mxu0 0.0
    %544 = vmatprep.subr.mxu0 0.0
    %545 = vmatpush1.msra.mxu0 0.0
    %546 = vmatprep.subr.mxu0 0.0
    %547 = vmatpush1.msra.mxu0 0.0
    %548 = vmatprep.subr.mxu0 0.0
    %549 = vmatpush1.msra.mxu0 0.0
    %550 = vmatprep.subr.mxu0 0.0
    %551 = vmatpush1.msra.mxu0 0.0
    %552 = vmatprep.subr.mxu0 0.0
    %553 = vmatpush1.msra.mxu0 0.0
    %554 = vmatprep.subr.mxu0 0.0
    %555 = vmatpush1.msra.mxu0 0.0
    %556 = vmatprep.subr.mxu0 0.0
    %557 = vmatpush1.msra.mxu0 0.0
    %558 = vmatprep.subr.mxu0 0.0
    %559 = vmatpush1.msra.mxu0 0.0
    %560 = vmatprep.subr.mxu0 0.0
    %561 = vmatpush1.msra.mxu0 0.0
    %562 = vmatprep.subr.mxu0 0.0
    %563 = vmatpush1.msra.mxu0 0.0
    %564 = vmatprep.subr.mxu0 0.0
    %565 = vmatpush1.msra.mxu0 0.0
    %566 = vmatprep.subr.mxu0 0.0
    %567 = vmatpush1.msra.mxu0 %v463
    %568 = vmatprep.subr.mxu0 0.0
    %569 = vmatpush1.msra.mxu0 %v462
    %570 = vmatprep.subr.mxu0 0.0
    %571 = vmatpush1.msra.mxu0 %v461
    %572 = vmatprep.subr.mxu0 0.0
    %573 = vmatpush2.msra.mxu0 0.0
    %574 = vmatprep.subr.mxu0 0.0
    %575 = vmatpush2.msra.mxu0 0.0
    %576 = vmatprep.subr.mxu0 0.0
    %577 = vmatpush2.msra.mxu0 0.0
    %578 = vmatprep.subr.mxu0 0.0
    %579 = vmatpush2.msra.mxu0 0.0
    %580 = vmatprep.subr.mxu0 0.0
    %581 = vmatpush2.msra.mxu0 0.0
    %582 = vmatprep.subr.mxu0 0.0
    %583 = vmatpush2.msra.mxu0 0.0
    %584 = vmatprep.subr.mxu0 0.0
    %585 = vmatpush2.msra.mxu0 0.0
    %586 = vmatprep.subr.mxu0 0.0
    %587 = vmatpush2.msra.mxu0 0.0
    %588 = vmatprep.subr.mxu0 0.0
    %589 = vmatpush2.msra.mxu0 0.0
    %590 = vmatprep.subr.mxu0 0.0
    %591 = vmatpush2.msra.mxu0 0.0
    %592 = vmatprep.subr.mxu0 0.0
    %593 = vmatpush2.msra.mxu0 0.0
    %594 = vmatprep.subr.mxu0 0.0
    %595 = vmatpush2.msra.mxu0 0.0
    %596 = vmatprep.subr.mxu0 0.0
    %597 = vmatpush2.msra.mxu0 0.0
    %598 = vmatprep.subr.mxu0 0.0
    %599 = vmatpush2.msra.mxu0 0.0
    %600 = vmatprep.subr.mxu0 0.0
    %601 = vmatpush2.msra.mxu0 0.0
    %602 = vmatprep.subr.mxu0 0.0
    %603 = vmatpush2.msra.mxu0 0.0
    %604 = vmatprep.mubr.f32.mxu0 0.0
    %605 = vmatmul.mubr.f32.gmra.mxu0 %v210
    %v606 = vpop.f32.mrf.mxu0
    %v607 = vadd.f32 %v537, %v606
    %v608 = vpop.f32.mrf.mxu0
    %609 = vdwg.mxu0
    %v610 = vld [vmem:[%s9] sm:$0x1]
    %v612 = vlaneseq
    %v613 = vshrl.u32 %v612, 7
    %v614 = vsub.s32 0, %v613
    %v615 = vrot.slane %v610, %v614
    %v617 = vadd.f32 %v607, %v615
    %618 = vst.msk [vmem:[#allocation2] sm:$0x3] %vm285, %v617
    // Predicated region
    $region42: #{cnn_text_forward.1} parent=1 // pred_check
      _
    $region43: #{cnn_text_forward.1} parent=1 // pred_check_branch
      %620 = sbr.rel (0) target = $region45
    $region44: #{cnn_text_forward.1} parent=1 // pred_region
      %s622 = ssub.s32 32, 32
      %623 = vsyncadd [#allocation3], %s622
      %s625 = sshll.u32 [#allocation2], 4
      %s626 = int_to_ptr.vmem [resolvable:$true] %s625
      %628 = dma.vmem_to_hbm [thread:$0]  %s626, 32, %s10, [#allocation3]
    $region45: #{cnn_text_forward.1} parent=1 // pred_fallthru
      _
    // Predicated region
    $region46: #{cnn_text_forward.1} parent=1 // pred_check
      _
    $region47: #{cnn_text_forward.1} parent=1 // pred_check_branch
      %630 = sbr.rel (0) target = $region49
    $region48: #{cnn_text_forward.1} parent=1 // pred_region
      %631 = dma.done [#allocation3], 32
    $region49: #{cnn_text_forward.1} parent=1 // pred_fallthru
      _
    %632 = vsyncpa [#allocation3], 1

</llo_original>
